<compile_context>
chip_gen: v7x
topology: tpu7x:2x2x1
jax: 0.10.0
libtpu: 0.0.40
codegen_flags: <defaults>
</compile_context>

<pallas_src>
import jax
import jax.numpy as jnp
from jax.experimental import pallas as pl
from jax.experimental.pallas import tpu as pltpu

_LANE = 128


def _round_up(v, m):
    return ((v + m - 1) // m) * m


def _pad2(a, rows, cols):
    """Zero-pad a 2-D array up to (rows, cols)."""
    return jnp.pad(a, ((0, rows - a.shape[0]), (0, cols - a.shape[1])))


def _deepsets_kernel(
    x_ref,      # [TB, N, Fin]
    extra_ref,  # [TB, G]
    lw1_ref,    # [Fin, H1p]
    lb1_ref,    # [1,  H1p]
    lw2_ref,    # [H1p, Dlp]
    lb2_ref,    # [1,  Dlp]
    gw1a_ref,   # [Dlp, H2p]
    gw1b_ref,   # [G,   H2p]
    gb1_ref,    # [1,   H2p]
    gw2_ref,    # [H2p, Doutp]
    gb2_ref,    # [1,   Doutp]
    o_ref,      # [TB, Doutp]
):
    tb, n, fin = x_ref.shape
    h1p = lw1_ref.shape[1]

    # ---- local_nn layer 1 + Tanh on every set element (the only B*N-sized matmul) ----
    x = x_ref[...].reshape(tb * n, fin)
    h = jnp.tanh(
        jnp.dot(x, lw1_ref[...], preferred_element_type=jnp.float32) + lb1_ref[...]
    )

    # ---- reduce over set_dim=-2 (aggr='sum') BEFORE the second local linear ----
    # sum_n (h_n @ W2 + b2) == (sum_n h_n) @ W2 + n * b2   (linearity, shared weights)
    h_sum = jnp.sum(h.reshape(tb, n, h1p), axis=1)                       # [TB, H1p]
    y_red = (
        jnp.dot(h_sum, lw2_ref[...], preferred_element_type=jnp.float32)
        + n * lb2_ref[...]
    )                                                                    # [TB, Dlp]

    # ---- global_nn on cat([y_red, extra], -1); concat realised as split matmul ----
    g = jnp.tanh(
        jnp.dot(y_red, gw1a_ref[...], preferred_element_type=jnp.float32)
        + jnp.dot(extra_ref[...], gw1b_ref[...], preferred_element_type=jnp.float32)
        + gb1_ref[...]
    )
    out = jnp.dot(g, gw2_ref[...], preferred_element_type=jnp.float32) + gb2_ref[...]
    o_ref[...] = out.astype(o_ref.dtype)


def deepsets_forward(x, extra_global_input, params, *, target_rows=512):
    """Pallas wrapper. x: [B, N, Fin], extra_global_input: [B, G] -> [B, Dout] (f32)."""
    (lw1, lb1, lw2, lb2, gw1a, gw1b, gb1, gw2, gb2) = params
    x = x.astype(jnp.float32)
    extra_global_input = extra_global_input.astype(jnp.float32)
    B, N, Fin = x.shape
    G = extra_global_input.shape[-1]
    H1, Dl = lw2.shape
    H2, Dout = gw2.shape

    # --- lane-dense (zero) padding of intermediate / output feature dims (exact) ---
    H1p, Dlp = _round_up(H1, _LANE), _round_up(Dl, _LANE)
    H2p, Doutp = _round_up(H2, _LANE), _round_up(Dout, _LANE)
    lw1p = _pad2(lw1, Fin, H1p)
    lb1p = _pad2(lb1, 1, H1p)
    lw2p = _pad2(lw2, H1p, Dlp)
    lb2p = _pad2(lb2, 1, Dlp)
    gw1ap = _pad2(gw1a, Dlp, H2p)
    gw1bp = _pad2(gw1b, G, H2p)
    gb1p = _pad2(gb1, 1, H2p)
    gw2p = _pad2(gw2, H2p, Doutp)
    gb2p = _pad2(gb2, 1, Doutp)

    # --- batch tiling: ~target_rows of B*N rows per grid step, tile multiple of 8 ---
    tb = min(_round_up(max(1, target_rows // max(N, 1)), 8), _round_up(B, 8))
    B_pad = _round_up(B, tb)
    if B_pad != B:
        x = jnp.pad(x, ((0, B_pad - B), (0, 0), (0, 0)))
        extra_global_input = jnp.pad(extra_global_input, ((0, B_pad - B), (0, 0)))
    grid = (B_pad // tb,)

    def resident(a):
        """Full-array block, same block every grid step -> stays resident in VMEM."""
        nd = a.ndim
        return pl.BlockSpec(a.shape, lambda i, _nd=nd: (0,) * _nd)

    weights = (lw1p, lb1p, lw2p, lb2p, gw1ap, gw1bp, gb1p, gw2p, gb2p)

    out = pl.pallas_call(
        _deepsets_kernel,
        grid=grid,
        in_specs=[
            pl.BlockSpec((tb, N, Fin), lambda i: (i, 0, 0)),
            pl.BlockSpec((tb, G), lambda i: (i, 0)),
        ] + [resident(w) for w in weights],
        out_specs=pl.BlockSpec((tb, Doutp), lambda i: (i, 0)),
        out_shape=jax.ShapeDtypeStruct((B_pad, Doutp), jnp.float32),
        compiler_params=pltpu.CompilerParams(
            dimension_semantics=("parallel",),
        ),
    )(x, extra_global_input, *weights)

    return out[:B, :Dout]


def init_params(key, fin, h1, dl, g, h2, dout):
    """Deterministic PyTorch-Linear-style init (uniform +/- 1/sqrt(fan_in))."""
    keys = jax.random.split(key, 8)

    def lin_w(k, fan_in, fan_out):
        bound = 1.0 / jnp.sqrt(fan_in)
        return jax.random.uniform(k, (fan_in, fan_out), jnp.float32, -bound, bound)

    def lin_b(k, fan_in, fan_out):
        bound = 1.0 / jnp.sqrt(fan_in)
        return jax.random.uniform(k, (1, fan_out), jnp.float32, -bound, bound)

    lw1 = lin_w(keys[0], fin, h1)
    lb1 = lin_b(keys[1], fin, h1)
    lw2 = lin_w(keys[2], h1, dl)
    lb2 = lin_b(keys[3], h1, dl)
    # global first linear over cat([local_out, extra], -1): split into two blocks.
    gw1 = lin_w(keys[4], dl + g, h2)
    gw1a, gw1b = gw1[:dl, :], gw1[dl:, :]
    gb1 = lin_b(keys[5], dl + g, h2)
    gw2 = lin_w(keys[6], h2, dout)
    gb2 = lin_b(keys[7], h2, dout)
    return (lw1, lb1, lw2, lb2, gw1a, gw1b, gb1, gw2, gb2)


def deepsets_reference(x, extra, params):
    """Pure-JAX reference mirroring the PyTorch forward (for a sanity check)."""
    (lw1, lb1, lw2, lb2, gw1a, gw1b, gb1, gw2, gb2) = params
    h = jnp.tanh(x @ lw1 + lb1)          # local_nn layer 1 (+ Tanh)
    y = h @ lw2 + lb2                    # local_nn layer 2
    y = jnp.sum(y, axis=-2)              # reduce over set_dim=-2, aggr='sum'
    cat = jnp.concatenate([y, extra], axis=-1)
    gw1 = jnp.concatenate([gw1a, gw1b], axis=0)
    g = jnp.tanh(cat @ gw1 + gb1)        # global_nn layer 1 (+ Tanh)
    return g @ gw2 + gb2                 # global_nn layer 2


if __name__ == "__main__":
    # Small shapes consistent with the module's forward:
    B, N, Fin = 2, 8, 16          # batch, set size (set_dim=-2), per-element features
    H1, Dl = 32, 32               # local_nn hidden / output
    G = 8                         # extra_global_input features
    H2, Dout = 32, 16             # global_nn hidden / output

    key = jax.random.PRNGKey(0)
    kx, ke, kp = jax.random.split(key, 3)
    x = jax.random.normal(kx, (B, N, Fin), jnp.float32)
    extra = jax.random.normal(ke, (B, G), jnp.float32)
    params = init_params(kp, Fin, H1, Dl, G, H2, Dout)

    out = deepsets_forward(x, extra, params)
    out = jax.block_until_ready(out)

    ref = deepsets_reference(x, extra, params)
    assert out.shape == (B, Dout)
    assert jnp.allclose(out, ref, atol=1e-4, rtol=1e-4), "mismatch vs reference"

    print("KERNEL_OK")
</pallas_src>

<mosaic_0001>
module attributes {stable_mosaic.version = 11 : i64} {
  func.func @_deepsets_kernel(%arg0: i32, %arg1: memref<8x8x16xf32, #tpu.memory_space<vmem>>, %arg2: memref<8x8xf32, #tpu.memory_space<vmem>>, %arg3: memref<16x128xf32, #tpu.memory_space<vmem>>, %arg4: memref<1x128xf32, #tpu.memory_space<vmem>>, %arg5: memref<128x128xf32, #tpu.memory_space<vmem>>, %arg6: memref<1x128xf32, #tpu.memory_space<vmem>>, %arg7: memref<128x128xf32, #tpu.memory_space<vmem>>, %arg8: memref<8x128xf32, #tpu.memory_space<vmem>>, %arg9: memref<1x128xf32, #tpu.memory_space<vmem>>, %arg10: memref<128x128xf32, #tpu.memory_space<vmem>>, %arg11: memref<1x128xf32, #tpu.memory_space<vmem>>, %arg12: memref<8x128xf32, #tpu.memory_space<vmem>>) attributes {dimension_semantics = [#tpu.dimension_semantics<parallel>], iteration_bounds = array<i64: 1>, scalar_prefetch = 0 : i64, scratch_operands = 0 : i64, tpu.core_type = #tpu.core_type<tc>, window_params = [{transform_indices = @transform_0, window_bounds = array<i64: 8, 8, 16>}, {transform_indices = @transform_1, window_bounds = array<i64: 8, 8>}, {pipeline_mode = #tpu.pipeline_mode<synchronous>, transform_indices = @transform_2, window_bounds = array<i64: 16, 128>}, {pipeline_mode = #tpu.pipeline_mode<synchronous>, transform_indices = @transform_3, window_bounds = array<i64: 1, 128>}, {pipeline_mode = #tpu.pipeline_mode<synchronous>, transform_indices = @transform_4, window_bounds = array<i64: 128, 128>}, {pipeline_mode = #tpu.pipeline_mode<synchronous>, transform_indices = @transform_5, window_bounds = array<i64: 1, 128>}, {pipeline_mode = #tpu.pipeline_mode<synchronous>, transform_indices = @transform_6, window_bounds = array<i64: 128, 128>}, {pipeline_mode = #tpu.pipeline_mode<synchronous>, transform_indices = @transform_7, window_bounds = array<i64: 8, 128>}, {pipeline_mode = #tpu.pipeline_mode<synchronous>, transform_indices = @transform_8, window_bounds = array<i64: 1, 128>}, {pipeline_mode = #tpu.pipeline_mode<synchronous>, transform_indices = @transform_9, window_bounds = array<i64: 128, 128>}, {pipeline_mode = #tpu.pipeline_mode<synchronous>, transform_indices = @transform_10, window_bounds = array<i64: 1, 128>}, {transform_indices = @transform_11, window_bounds = array<i64: 8, 128>}]} {
    %c0 = arith.constant 0 : index
    %c0_0 = arith.constant 0 : index
    %c0_1 = arith.constant 0 : index
    %0 = vector.load %arg1[%c0, %c0_0, %c0_1] : memref<8x8x16xf32, #tpu.memory_space<vmem>>, vector<8x8x16xf32>
    %1 = vector.shape_cast %0 : vector<8x8x16xf32> to vector<64x16xf32>
    %c0_2 = arith.constant 0 : index
    %c0_3 = arith.constant 0 : index
    %2 = vector.load %arg3[%c0_2, %c0_3] : memref<16x128xf32, #tpu.memory_space<vmem>>, vector<16x128xf32>
    %cst = arith.constant dense<0.000000e+00> : vector<64x128xf32>
    %3 = tpu.matmul %1, %2, %cst {dimension_numbers = #tpu.dot_dimension_numbers<[1], [0], [0], [1], [0, 0, 1, 1], [], []>} : vector<64x16xf32>, vector<16x128xf32>, vector<64x128xf32> -> vector<64x128xf32>
    %c0_4 = arith.constant 0 : index
    %c0_5 = arith.constant 0 : index
    %4 = vector.load %arg4[%c0_4, %c0_5] : memref<1x128xf32, #tpu.memory_space<vmem>>, vector<1x128xf32>
    %5 = vector.broadcast %4 : vector<1x128xf32> to vector<64x128xf32>
    %6 = arith.addf %3, %5 : vector<64x128xf32>
    %7 = math.tanh %6 : vector<64x128xf32>
    %8 = vector.shape_cast %7 : vector<64x128xf32> to vector<8x8x128xf32>
    %cst_6 = arith.constant dense<0.000000e+00> : vector<8x128xf32>
    %9 = vector.multi_reduction <add>, %8, %cst_6 [1] : vector<8x8x128xf32> to vector<8x128xf32>
    %c0_7 = arith.constant 0 : index
    %c0_8 = arith.constant 0 : index
    %10 = vector.load %arg5[%c0_7, %c0_8] : memref<128x128xf32, #tpu.memory_space<vmem>>, vector<128x128xf32>
    %cst_9 = arith.constant dense<0.000000e+00> : vector<8x128xf32>
    %11 = tpu.matmul %9, %10, %cst_9 {dimension_numbers = #tpu.dot_dimension_numbers<[1], [0], [0], [1], [0, 0, 1, 1], [], []>} : vector<8x128xf32>, vector<128x128xf32>, vector<8x128xf32> -> vector<8x128xf32>
    %c0_10 = arith.constant 0 : index
    %c0_11 = arith.constant 0 : index
    %12 = vector.load %arg6[%c0_10, %c0_11] : memref<1x128xf32, #tpu.memory_space<vmem>>, vector<1x128xf32>
    %cst_12 = arith.constant 8.000000e+00 : f32
    %13 = vector.broadcast %cst_12 : f32 to vector<1x128xf32>
    %14 = arith.mulf %13, %12 : vector<1x128xf32>
    %15 = vector.broadcast %14 : vector<1x128xf32> to vector<8x128xf32>
    %16 = arith.addf %11, %15 : vector<8x128xf32>
    %c0_13 = arith.constant 0 : index
    %c0_14 = arith.constant 0 : index
    %17 = vector.load %arg7[%c0_13, %c0_14] : memref<128x128xf32, #tpu.memory_space<vmem>>, vector<128x128xf32>
    %cst_15 = arith.constant dense<0.000000e+00> : vector<8x128xf32>
    %18 = tpu.matmul %16, %17, %cst_15 {dimension_numbers = #tpu.dot_dimension_numbers<[1], [0], [0], [1], [0, 0, 1, 1], [], []>} : vector<8x128xf32>, vector<128x128xf32>, vector<8x128xf32> -> vector<8x128xf32>
    %c0_16 = arith.constant 0 : index
    %c0_17 = arith.constant 0 : index
    %19 = vector.load %arg2[%c0_16, %c0_17] : memref<8x8xf32, #tpu.memory_space<vmem>>, vector<8x8xf32>
    %c0_18 = arith.constant 0 : index
    %c0_19 = arith.constant 0 : index
    %20 = vector.load %arg8[%c0_18, %c0_19] : memref<8x128xf32, #tpu.memory_space<vmem>>, vector<8x128xf32>
    %cst_20 = arith.constant dense<0.000000e+00> : vector<8x128xf32>
    %21 = tpu.matmul %19, %20, %cst_20 {dimension_numbers = #tpu.dot_dimension_numbers<[1], [0], [0], [1], [0, 0, 1, 1], [], []>} : vector<8x8xf32>, vector<8x128xf32>, vector<8x128xf32> -> vector<8x128xf32>
    %22 = arith.addf %18, %21 : vector<8x128xf32>
    %c0_21 = arith.constant 0 : index
    %c0_22 = arith.constant 0 : index
    %23 = vector.load %arg9[%c0_21, %c0_22] : memref<1x128xf32, #tpu.memory_space<vmem>>, vector<1x128xf32>
    %24 = vector.broadcast %23 : vector<1x128xf32> to vector<8x128xf32>
    %25 = arith.addf %22, %24 : vector<8x128xf32>
    %26 = math.tanh %25 : vector<8x128xf32>
    %c0_23 = arith.constant 0 : index
    %c0_24 = arith.constant 0 : index
    %27 = vector.load %arg10[%c0_23, %c0_24] : memref<128x128xf32, #tpu.memory_space<vmem>>, vector<128x128xf32>
    %cst_25 = arith.constant dense<0.000000e+00> : vector<8x128xf32>
    %28 = tpu.matmul %26, %27, %cst_25 {dimension_numbers = #tpu.dot_dimension_numbers<[1], [0], [0], [1], [0, 0, 1, 1], [], []>} : vector<8x128xf32>, vector<128x128xf32>, vector<8x128xf32> -> vector<8x128xf32>
    %c0_26 = arith.constant 0 : index
    %c0_27 = arith.constant 0 : index
    %29 = vector.load %arg11[%c0_26, %c0_27] : memref<1x128xf32, #tpu.memory_space<vmem>>, vector<1x128xf32>
    %30 = vector.broadcast %29 : vector<1x128xf32> to vector<8x128xf32>
    %31 = arith.addf %28, %30 : vector<8x128xf32>
    %c0_28 = arith.constant 0 : index
    %c0_29 = arith.constant 0 : index
    %32 = vector.load %arg12[%c0_28, %c0_29] : memref<8x128xf32, #tpu.memory_space<vmem>>, vector<8x128xf32>
    tpu.vector_store %arg12[%c0_28, %c0_29], %31 {strides = array<i32>} : memref<8x128xf32, #tpu.memory_space<vmem>>, vector<8x128xf32>,
    return
  }
  func.func @transform_0(%arg0: i32) -> (i32, i32, i32) {
    %c0_i32 = arith.constant 0 : i32
    %c0_i32_0 = arith.constant 0 : i32
    %c0_i32_1 = arith.constant 0 : i32
    return %arg0, %c0_i32, %c0_i32_0 : i32, i32, i32
  }
  func.func @transform_1(%arg0: i32) -> (i32, i32) {
    %c0_i32 = arith.constant 0 : i32
    %c0_i32_0 = arith.constant 0 : i32
    return %arg0, %c0_i32 : i32, i32
  }
  func.func @transform_2(%arg0: i32) -> (i32, i32) {
    %c0_i32 = arith.constant 0 : i32
    %c0_i32_0 = arith.constant 0 : i32
    %c0_i32_1 = arith.constant 0 : i32
    return %c0_i32, %c0_i32_0 : i32, i32
  }
  func.func @transform_3(%arg0: i32) -> (i32, i32) {
    %c0_i32 = arith.constant 0 : i32
    %c0_i32_0 = arith.constant 0 : i32
    %c0_i32_1 = arith.constant 0 : i32
    return %c0_i32, %c0_i32_0 : i32, i32
  }
  func.func @transform_4(%arg0: i32) -> (i32, i32) {
    %c0_i32 = arith.constant 0 : i32
    %c0_i32_0 = arith.constant 0 : i32
    %c0_i32_1 = arith.constant 0 : i32
    return %c0_i32, %c0_i32_0 : i32, i32
  }
  func.func @transform_5(%arg0: i32) -> (i32, i32) {
    %c0_i32 = arith.constant 0 : i32
    %c0_i32_0 = arith.constant 0 : i32
    %c0_i32_1 = arith.constant 0 : i32
    return %c0_i32, %c0_i32_0 : i32, i32
  }
  func.func @transform_6(%arg0: i32) -> (i32, i32) {
    %c0_i32 = arith.constant 0 : i32
    %c0_i32_0 = arith.constant 0 : i32
    %c0_i32_1 = arith.constant 0 : i32
    return %c0_i32, %c0_i32_0 : i32, i32
  }
  func.func @transform_7(%arg0: i32) -> (i32, i32) {
    %c0_i32 = arith.constant 0 : i32
    %c0_i32_0 = arith.constant 0 : i32
    %c0_i32_1 = arith.constant 0 : i32
    return %c0_i32, %c0_i32_0 : i32, i32
  }
  func.func @transform_8(%arg0: i32) -> (i32, i32) {
    %c0_i32 = arith.constant 0 : i32
    %c0_i32_0 = arith.constant 0 : i32
    %c0_i32_1 = arith.constant 0 : i32
    return %c0_i32, %c0_i32_0 : i32, i32
  }
  func.func @transform_9(%arg0: i32) -> (i32, i32) {
    %c0_i32 = arith.constant 0 : i32
    %c0_i32_0 = arith.constant 0 : i32
    %c0_i32_1 = arith.constant 0 : i32
    return %c0_i32, %c0_i32_0 : i32, i32
  }
  func.func @transform_10(%arg0: i32) -> (i32, i32) {
    %c0_i32 = arith.constant 0 : i32
    %c0_i32_0 = arith.constant 0 : i32
    %c0_i32_1 = arith.constant 0 : i32
    return %c0_i32, %c0_i32_0 : i32, i32
  }
  func.func @transform_11(%arg0: i32) -> (i32, i32) {
    %c0_i32 = arith.constant 0 : i32
    %c0_i32_0 = arith.constant 0 : i32
    return %arg0, %c0_i32 : i32, i32
  }
}

</mosaic_0001>

<llo_original>
// kernel: tpu_custom_call.1
$region0: #{tpu_custom_call.1}
  #allocation0 [shape = 'u32[]', space=smem, size = 0x4, offset = 0x4, fixed_abs, tag = 'smem constant byte address 0x4 - core index']
  #allocation1 [shape = 'u32[144,128]{1,0:T(1,128)}', space=vmem, size = 0x12000, scoped, tag = 'internal scratch']
  %s0 = inlined_call_operand.hbm [shape: f32[8,8,16], index: 0, kind: input, shape index: {}]
  %s1 = inlined_call_operand.hbm [shape: f32[8,8], index: 1, kind: input, shape index: {}]
  %s2 = inlined_call_operand.hbm [shape: f32[16,128], index: 2, kind: input, shape index: {}]
  %s3 = inlined_call_operand.vmem [shape: f32[1,128], index: 3, kind: input, shape index: {}]
  %s4 = inlined_call_operand.hbm [shape: f32[128,128], index: 4, kind: input, shape index: {}]
  %s5 = inlined_call_operand.vmem [shape: f32[1,128], index: 5, kind: input, shape index: {}]
  %s6 = inlined_call_operand.hbm [shape: f32[128,128], index: 6, kind: input, shape index: {}]
  %s7 = inlined_call_operand.vmem [shape: f32[8,128], index: 7, kind: input, shape index: {}]
  %s8 = inlined_call_operand.vmem [shape: f32[1,128], index: 8, kind: input, shape index: {}]
  %s9 = inlined_call_operand.hbm [shape: f32[128,128], index: 9, kind: input, shape index: {}]
  %s10 = inlined_call_operand.vmem [shape: f32[1,128], index: 10, kind: input, shape index: {}]
  %s11 = inlined_call_operand.hbm [shape: f32[8,128], index: 11, kind: output, shape index: {}]
  %s12 = sld [smem:[#allocation0]]
  $region78: #{tpu_custom_call.1} parent=0
    _
  %s14 = ssub.s32 1, %s12
  %s15 = scalar_select 0, %s14, %s12
  $region1: #{tpu_custom_call.1} parent=0
    #allocation2 [shape = 'u8[32768]{0}', space=vmem, size = 0x8000, scoped, tag = 'input window, operand 0, single buffered']
    #allocation3 [shape = 's32[1]{0}', space=sflag, size = 0x4, scoped, tag = 'scoped memory for tpu_custom_call.1']
    #allocation4 [shape = 's32[1]{0}', space=sflag, size = 0x4, scoped, tag = 'scoped memory for tpu_custom_call.1']
    #allocation5 [shape = 'u8[4096]{0}', space=vmem, size = 0x1000, scoped, tag = 'input window, operand 1, single buffered']
    #allocation6 [shape = 's32[1]{0}', space=sflag, size = 0x4, scoped, tag = 'scoped memory for tpu_custom_call.1']
    #allocation7 [shape = 'u8[8192]{0}', space=vmem, size = 0x2000, scoped, tag = 'input window, operand 2, single buffered']
    #allocation8 [shape = 'u8[65536]{0}', space=vmem, size = 0x10000, scoped, tag = 'input window, operand 4, single buffered']
    #allocation9 [shape = 's32[1]{0}', space=sflag, size = 0x4, scoped, tag = 'scoped memory for tpu_custom_call.1']
    #allocation10 [shape = 'u8[65536]{0}', space=vmem, size = 0x10000, scoped, tag = 'input window, operand 6, single buffered']
    #allocation11 [shape = 'u8[65536]{0}', space=vmem, size = 0x10000, scoped, tag = 'input window, operand 9, single buffered']
    #allocation12 [shape = 's32[1]{0}', space=sflag, size = 0x4, scoped, tag = 'scoped memory for tpu_custom_call.1']
    #allocation13 [shape = 'u8[4096]{0}', space=vmem, size = 0x1000, scoped, tag = 'output window, operand 0, single buffered']
    %16 = vsyncpa [#allocation3], 0
    %17 = vsyncpa [#allocation6], 0
    %18 = vsyncpa [#allocation9], 0
    %19 = vsyncpa [#allocation12], 0
    %20 = vsyncpa [#allocation4], 0
    // Predicated region
    $region2: #{tpu_custom_call.1} parent=1 // pred_check
      _
    $region3: #{tpu_custom_call.1} parent=1 // pred_check_branch
      %22 = sbr.rel (0) target = $region5
    $region4: #{tpu_custom_call.1} parent=1 // pred_region
      %s24 = ssub.s32 1024, 1024
      %25 = vsyncadd [#allocation3], %s24
      %s26 = sshll.u32 [#allocation2], 4
      %s27 = int_to_ptr.vmem [resolvable:$true] %s26
      %32 = dma.hbm_to_vmem [thread:$0]  %s0, 1024, %s27, [#allocation3], 128, 128, 8
    $region5: #{tpu_custom_call.1} parent=1 // pred_fallthru
      _
    // Predicated region
    $region6: #{tpu_custom_call.1} parent=1 // pred_check
      _
    $region7: #{tpu_custom_call.1} parent=1 // pred_check_branch
      %34 = sbr.rel (0) target = $region9
    $region8: #{tpu_custom_call.1} parent=1 // pred_region
      %s36 = ssub.s32 128, 128
      %37 = vsyncadd [#allocation6], %s36
      %s39 = sshll.u32 [#allocation5], 4
      %s40 = int_to_ptr.vmem [resolvable:$true] %s39
      %42 = dma.hbm_to_vmem [thread:$0]  %s1, 128, %s40, [#allocation6]
    $region9: #{tpu_custom_call.1} parent=1 // pred_fallthru
      _
    // Predicated region
    $region10: #{tpu_custom_call.1} parent=1 // pred_check
      _
    $region11: #{tpu_custom_call.1} parent=1 // pred_check_branch
      %44 = sbr.rel (0) target = $region13
    $region12: #{tpu_custom_call.1} parent=1 // pred_region
      %s46 = ssub.s32 256, 256
      %47 = vsyncadd [#allocation6], %s46
      %s48 = sshll.u32 [#allocation7], 4
      %s49 = int_to_ptr.vmem [resolvable:$true] %s48
      %54 = dma.hbm_to_vmem [thread:$0]  %s2, 256, %s49, [#allocation6], 128, 128, 8
    $region13: #{tpu_custom_call.1} parent=1 // pred_fallthru
      _
    // Predicated region
    $region14: #{tpu_custom_call.1} parent=1 // pred_check
      _
    $region15: #{tpu_custom_call.1} parent=1 // pred_check_branch
      %56 = sbr.rel (0) target = $region17
    $region16: #{tpu_custom_call.1} parent=1 // pred_region
      _
    $region17: #{tpu_custom_call.1} parent=1 // pred_fallthru
      _
    // Predicated region
    $region18: #{tpu_custom_call.1} parent=1 // pred_check
      _
    $region19: #{tpu_custom_call.1} parent=1 // pred_check_branch
      %58 = sbr.rel (0) target = $region21
    $region20: #{tpu_custom_call.1} parent=1 // pred_region
      %s60 = ssub.s32 2048, 2048
      %61 = vsyncadd [#allocation9], %s60
      %s62 = sshll.u32 [#allocation8], 4
      %s63 = int_to_ptr.vmem [resolvable:$true] %s62
      %68 = dma.hbm_to_vmem [thread:$0]  %s4, 2048, %s63, [#allocation9], 128, 128, 8
    $region21: #{tpu_custom_call.1} parent=1 // pred_fallthru
      _
    // Predicated region
    $region22: #{tpu_custom_call.1} parent=1 // pred_check
      _
    $region23: #{tpu_custom_call.1} parent=1 // pred_check_branch
      %70 = sbr.rel (0) target = $region25
    $region24: #{tpu_custom_call.1} parent=1 // pred_region
      _
    $region25: #{tpu_custom_call.1} parent=1 // pred_fallthru
      _
    // Predicated region
    $region26: #{tpu_custom_call.1} parent=1 // pred_check
      _
    $region27: #{tpu_custom_call.1} parent=1 // pred_check_branch
      %72 = sbr.rel (0) target = $region29
    $region28: #{tpu_custom_call.1} parent=1 // pred_region
      %s74 = ssub.s32 2048, 2048
      %75 = vsyncadd [#allocation9], %s74
      %s76 = sshll.u32 [#allocation10], 4
      %s77 = int_to_ptr.vmem [resolvable:$true] %s76
      %82 = dma.hbm_to_vmem [thread:$0]  %s6, 2048, %s77, [#allocation9], 128, 128, 8
    $region29: #{tpu_custom_call.1} parent=1 // pred_fallthru
      _
    // Predicated region
    $region30: #{tpu_custom_call.1} parent=1 // pred_check
      _
    $region31: #{tpu_custom_call.1} parent=1 // pred_check_branch
      %84 = sbr.rel (0) target = $region33
    $region32: #{tpu_custom_call.1} parent=1 // pred_region
      _
    $region33: #{tpu_custom_call.1} parent=1 // pred_fallthru
      _
    // Predicated region
    $region34: #{tpu_custom_call.1} parent=1 // pred_check
      _
    $region35: #{tpu_custom_call.1} parent=1 // pred_check_branch
      %86 = sbr.rel (0) target = $region37
    $region36: #{tpu_custom_call.1} parent=1 // pred_region
      _
    $region37: #{tpu_custom_call.1} parent=1 // pred_fallthru
      _
    // Predicated region
    $region38: #{tpu_custom_call.1} parent=1 // pred_check
      _
    $region39: #{tpu_custom_call.1} parent=1 // pred_check_branch
      %88 = sbr.rel (0) target = $region41
    $region40: #{tpu_custom_call.1} parent=1 // pred_region
      %s90 = ssub.s32 2048, 2048
      %91 = vsyncadd [#allocation12], %s90
      %s92 = sshll.u32 [#allocation11], 4
      %s93 = int_to_ptr.vmem [resolvable:$true] %s92
      %98 = dma.hbm_to_vmem [thread:$0]  %s9, 2048, %s93, [#allocation12], 128, 128, 8
    $region41: #{tpu_custom_call.1} parent=1 // pred_fallthru
      _
    // Predicated region
    $region42: #{tpu_custom_call.1} parent=1 // pred_check
      _
    $region43: #{tpu_custom_call.1} parent=1 // pred_check_branch
      %100 = sbr.rel (0) target = $region45
    $region44: #{tpu_custom_call.1} parent=1 // pred_region
      _
    $region45: #{tpu_custom_call.1} parent=1 // pred_fallthru
      _
    // Predicated region
    $region46: #{tpu_custom_call.1} parent=1 // pred_check
      _
    $region47: #{tpu_custom_call.1} parent=1 // pred_check_branch
      %102 = sbr.rel (0) target = $region49
    $region48: #{tpu_custom_call.1} parent=1 // pred_region
      %103 = dma.done [#allocation3], 1024
    $region49: #{tpu_custom_call.1} parent=1 // pred_fallthru
      _
    // Predicated region
    $region50: #{tpu_custom_call.1} parent=1 // pred_check
      _
    $region51: #{tpu_custom_call.1} parent=1 // pred_check_branch
      %105 = sbr.rel (0) target = $region53
    $region52: #{tpu_custom_call.1} parent=1 // pred_region
      %106 = dma.done [#allocation6], 128
    $region53: #{tpu_custom_call.1} parent=1 // pred_fallthru
      _
    // Predicated region
    $region54: #{tpu_custom_call.1} parent=1 // pred_check
      _
    $region55: #{tpu_custom_call.1} parent=1 // pred_check_branch
      %108 = sbr.rel (0) target = $region57
    $region56: #{tpu_custom_call.1} parent=1 // pred_region
      %109 = dma.done [#allocation6], 256
    $region57: #{tpu_custom_call.1} parent=1 // pred_fallthru
      _
    // Predicated region
    $region58: #{tpu_custom_call.1} parent=1 // pred_check
      _
    $region59: #{tpu_custom_call.1} parent=1 // pred_check_branch
      %111 = sbr.rel (0) target = $region61
    $region60: #{tpu_custom_call.1} parent=1 // pred_region
      %112 = dma.done [#allocation9], 2048
    $region61: #{tpu_custom_call.1} parent=1 // pred_fallthru
      _
    // Predicated region
    $region62: #{tpu_custom_call.1} parent=1 // pred_check
      _
    $region63: #{tpu_custom_call.1} parent=1 // pred_check_branch
      %114 = sbr.rel (0) target = $region65
    $region64: #{tpu_custom_call.1} parent=1 // pred_region
      %115 = dma.done [#allocation9], 2048
    $region65: #{tpu_custom_call.1} parent=1 // pred_fallthru
      _
    // Predicated region
    $region66: #{tpu_custom_call.1} parent=1 // pred_check
      _
    $region67: #{tpu_custom_call.1} parent=1 // pred_check_branch
      %117 = sbr.rel (0) target = $region69
    $region68: #{tpu_custom_call.1} parent=1 // pred_region
      %118 = dma.done [#allocation12], 2048
    $region69: #{tpu_custom_call.1} parent=1 // pred_fallthru
      _
    %v119 = vld [vmem:[#allocation2] sm:$0xff]
    %v120 = vld [vmem:[#allocation2 + $0x8] sm:$0xff]
    %v121 = vld [vmem:[#allocation2 + $0x10] sm:$0xff]
    %v122 = vld [vmem:[#allocation2 + $0x18] sm:$0xff]
    %v123 = vld [vmem:[#allocation2 + $0x20] sm:$0xff]
    %v124 = vld [vmem:[#allocation2 + $0x28] sm:$0xff]
    %v125 = vld [vmem:[#allocation2 + $0x30] sm:$0xff]
    %v126 = vld [vmem:[#allocation2 + $0x38] sm:$0xff]
    %v127 = vld [vmem:[#allocation7] sm:$0xff]
    %v128 = vld [vmem:[#allocation7 + $0x8] sm:$0xff]
    %v129 = vld [vmem:[%s3] sm:$0x1]
    %v131 = vlaneseq
    %v132 = vshrl.u32 %v131, 7
    %v133 = vsub.s32 0, %v132
    %v134 = vrot.slane %v129, %v133
    %vm136 = vcmask 130048
    %v138 = vsel %vm136, %v119, 0
    %v141 = vsel %vm136, %v120, 0
    %v144 = vsel %vm136, %v121, 0
    %v147 = vsel %vm136, %v122, 0
    %v150 = vsel %vm136, %v123, 0
    %v153 = vsel %vm136, %v124, 0
    %v156 = vsel %vm136, %v125, 0
    %v159 = vsel %vm136, %v126, 0
    %161 = vmatprep.subr.mxu0 0.0
    %162 = vmatpush1.msra.mxu0 %v127
    %163 = vmatprep.subr.mxu0 0.0
    %164 = vmatpush1.msra.mxu0 %v128
    %165 = vmatprep.subr.mxu0 0.0
    %166 = vmatpush1.msra.mxu0 0.0
    %167 = vmatprep.subr.mxu0 0.0
    %168 = vmatpush1.msra.mxu0 0.0
    %169 = vmatprep.subr.mxu0 0.0
    %170 = vmatpush1.msra.mxu0 0.0
    %171 = vmatprep.subr.mxu0 0.0
    %172 = vmatpush1.msra.mxu0 0.0
    %173 = vmatprep.subr.mxu0 0.0
    %174 = vmatpush1.msra.mxu0 0.0
    %175 = vmatprep.subr.mxu0 0.0
    %176 = vmatpush1.msra.mxu0 0.0
    %177 = vmatprep.subr.mxu0 0.0
    %178 = vmatpush1.msra.mxu0 0.0
    %179 = vmatprep.subr.mxu0 0.0
    %180 = vmatpush1.msra.mxu0 0.0
    %181 = vmatprep.subr.mxu0 0.0
    %182 = vmatpush1.msra.mxu0 0.0
    %183 = vmatprep.subr.mxu0 0.0
    %184 = vmatpush1.msra.mxu0 0.0
    %185 = vmatprep.subr.mxu0 0.0
    %186 = vmatpush1.msra.mxu0 0.0
    %187 = vmatprep.subr.mxu0 0.0
    %188 = vmatpush1.msra.mxu0 0.0
    %189 = vmatprep.subr.mxu0 0.0
    %190 = vmatpush1.msra.mxu0 0.0
    %191 = vmatprep.subr.mxu0 0.0
    %192 = vmatpush1.msra.mxu0 0.0
    %193 = vmatprep.subr.mxu0 0.0
    %194 = vmatpush1.msra.mxu0 0.0
    %195 = vmatprep.subr.mxu0 0.0
    %196 = vmatpush1.msra.mxu0 0.0
    %197 = vmatprep.subr.mxu0 0.0
    %198 = vmatpush1.msra.mxu0 0.0
    %199 = vmatprep.subr.mxu0 0.0
    %200 = vmatpush1.msra.mxu0 0.0
    %201 = vmatprep.subr.mxu0 0.0
    %202 = vmatpush1.msra.mxu0 0.0
    %203 = vmatprep.subr.mxu0 0.0
    %204 = vmatpush1.msra.mxu0 0.0
    %205 = vmatprep.subr.mxu0 0.0
    %206 = vmatpush1.msra.mxu0 0.0
    %207 = vmatprep.subr.mxu0 0.0
    %208 = vmatpush1.msra.mxu0 0.0
    %209 = vmatprep.subr.mxu0 0.0
    %210 = vmatpush1.msra.mxu0 0.0
    %211 = vmatprep.subr.mxu0 0.0
    %212 = vmatpush1.msra.mxu0 0.0
    %213 = vmatprep.subr.mxu0 0.0
    %214 = vmatpush1.msra.mxu0 0.0
    %215 = vmatprep.subr.mxu0 0.0
    %216 = vmatpush1.msra.mxu0 0.0
    %217 = vmatprep.subr.mxu0 0.0
    %218 = vmatpush1.msra.mxu0 0.0
    %219 = vmatprep.subr.mxu0 0.0
    %220 = vmatpush1.msra.mxu0 0.0
    %221 = vmatprep.subr.mxu0 0.0
    %222 = vmatpush1.msra.mxu0 0.0
    %223 = vmatprep.subr.mxu0 0.0
    %224 = vmatpush1.msra.mxu0 0.0
    %225 = vmatprep.mubr.f32.mxu0 0.0
    %226 = vmatmul.mubr.f32.gmra.mrb[0].mxu0 %v138
    %v227 = vpop.f32.mrb[0].mxu0
    %v228 = vadd.f32 %v134, %v227
    %v229 = vpop.f32.mrb[0].mxu0
    %230 = vmatprep.mubr.f32.mxu0 0.0
    %231 = vmatmul.mubr.f32.gmra.mrb[0].mxu0 %v141
    %v232 = vpop.f32.mrb[0].mxu0
    %v233 = vadd.f32 %v134, %v232
    %v234 = vpop.f32.mrb[0].mxu0
    %235 = vmatprep.mubr.f32.mxu0 0.0
    %236 = vmatmul.mubr.f32.gmra.mrb[0].mxu0 %v144
    %v237 = vpop.f32.mrb[0].mxu0
    %v238 = vadd.f32 %v134, %v237
    %v239 = vpop.f32.mrb[0].mxu0
    %240 = vmatprep.mubr.f32.mxu0 0.0
    %241 = vmatmul.mubr.f32.gmra.mrb[0].mxu0 %v147
    %v242 = vpop.f32.mrb[0].mxu0
    %v243 = vadd.f32 %v134, %v242
    %v244 = vpop.f32.mrb[0].mxu0
    %245 = vmatprep.mubr.f32.mxu0 0.0
    %246 = vmatmul.mubr.f32.gmra.mrb[0].mxu0 %v150
    %v247 = vpop.f32.mrb[0].mxu0
    %v248 = vadd.f32 %v134, %v247
    %v249 = vpop.f32.mrb[0].mxu0
    %250 = vmatprep.mubr.f32.mxu0 0.0
    %251 = vmatmul.mubr.f32.gmra.mrb[0].mxu0 %v153
    %v252 = vpop.f32.mrb[0].mxu0
    %v253 = vadd.f32 %v134, %v252
    %v254 = vpop.f32.mrb[0].mxu0
    %255 = vmatprep.mubr.f32.mxu0 0.0
    %256 = vmatmul.mubr.f32.gmra.mrb[0].mxu0 %v156
    %v257 = vpop.f32.mrb[0].mxu0
    %v258 = vadd.f32 %v134, %v257
    %v259 = vpop.f32.mrb[0].mxu0
    %260 = vmatprep.mubr.f32.mxu0 0.0
    %261 = vmatmul.mubr.f32.gmra.mrb[0].mxu0 %v159
    %v262 = vpop.f32.mrb[0].mxu0
    %v263 = vadd.f32 %v134, %v262
    %v264 = vpop.f32.mrb[0].mxu0
    %265 = vdwg.mxu0
    %v266 = vtanh.pop %v228
    %v267 = vtanh.pop %v233
    %v268 = vtanh.pop %v238
    %v269 = vtanh.pop %v243
    %v270 = vtanh.pop %v248
    %v271 = vtanh.pop %v253
    %v272 = vtanh.pop %v258
    %v273 = vtanh.pop %v263
    %v274 = vrot.slane %v266, 4
    %v275 = vadd.f32 %v266, %v274
    %v276 = vrot.slane %v275, 2
    %v277 = vadd.f32 %v275, %v276
    %v278 = vrot.slane %v277, 1
    %v279 = vadd.f32 %v277, %v278
    %v280 = vrot.slane %v267, 4
    %v281 = vadd.f32 %v267, %v280
    %v282 = vrot.slane %v281, 2
    %v283 = vadd.f32 %v281, %v282
    %v284 = vrot.slane %v283, 1
    %v285 = vadd.f32 %v283, %v284
    %v286 = vrot.slane %v268, 4
    %v287 = vadd.f32 %v268, %v286
    %v288 = vrot.slane %v287, 2
    %v289 = vadd.f32 %v287, %v288
    %v290 = vrot.slane %v289, 1
    %v291 = vadd.f32 %v289, %v290
    %v292 = vrot.slane %v269, 4
    %v293 = vadd.f32 %v269, %v292
    %v294 = vrot.slane %v293, 2
    %v295 = vadd.f32 %v293, %v294
    %v296 = vrot.slane %v295, 1
    %v297 = vadd.f32 %v295, %v296
    %v298 = vrot.slane %v270, 4
    %v299 = vadd.f32 %v270, %v298
    %v300 = vrot.slane %v299, 2
    %v301 = vadd.f32 %v299, %v300
    %v302 = vrot.slane %v301, 1
    %v303 = vadd.f32 %v301, %v302
    %v304 = vrot.slane %v271, 4
    %v305 = vadd.f32 %v271, %v304
    %v306 = vrot.slane %v305, 2
    %v307 = vadd.f32 %v305, %v306
    %v308 = vrot.slane %v307, 1
    %v309 = vadd.f32 %v307, %v308
    %v310 = vrot.slane %v272, 4
    %v311 = vadd.f32 %v272, %v310
    %v312 = vrot.slane %v311, 2
    %v313 = vadd.f32 %v311, %v312
    %v314 = vrot.slane %v313, 1
    %v315 = vadd.f32 %v313, %v314
    %v316 = vrot.slane %v273, 4
    %v317 = vadd.f32 %v273, %v316
    %v318 = vrot.slane %v317, 2
    %v319 = vadd.f32 %v317, %v318
    %v320 = vrot.slane %v319, 1
    %v321 = vadd.f32 %v319, %v320
    %v322 = vld [vmem:[#allocation8] sm:$0xff]
    %v323 = vld [vmem:[#allocation8 + $0x8] sm:$0xff]
    %v324 = vld [vmem:[#allocation8 + $0x10] sm:$0xff]
    %v325 = vld [vmem:[#allocation8 + $0x18] sm:$0xff]
    %v326 = vld [vmem:[#allocation8 + $0x20] sm:$0xff]
    %v327 = vld [vmem:[#allocation8 + $0x28] sm:$0xff]
    %v328 = vld [vmem:[#allocation8 + $0x30] sm:$0xff]
    %v329 = vld [vmem:[#allocation8 + $0x38] sm:$0xff]
    %v330 = vld [vmem:[#allocation8 + $0x40] sm:$0xff]
    %v331 = vld [vmem:[#allocation8 + $0x48] sm:$0xff]
    %v332 = vld [vmem:[#allocation8 + $0x50] sm:$0xff]
    %v333 = vld [vmem:[#allocation8 + $0x58] sm:$0xff]
    %v334 = vld [vmem:[#allocation8 + $0x60] sm:$0xff]
    %v335 = vld [vmem:[#allocation8 + $0x68] sm:$0xff]
    %v336 = vld [vmem:[#allocation8 + $0x70] sm:$0xff]
    %v337 = vld [vmem:[#allocation8 + $0x78] sm:$0xff]
    %v338 = vld [vmem:[%s5] sm:$0x1]
    %v339 = vmul.f32 %v338, 8.0
    %v341 = vlaneseq
    %v342 = vshrl.u32 %v341, 7
    %v343 = vsub.s32 0, %v342
    %v344 = vrot.slane %v339, %v343
    %vm354 = vcmask 1041409
    %v355 = vsel %vm354, %v285, %v279
    %vm356 = vcmask 1042434
    %v357 = vsel %vm356, %v291, %v355
    %vm358 = vcmask 1043459
    %v359 = vsel %vm358, %v297, %v357
    %vm360 = vcmask 1044484
    %v361 = vsel %vm360, %v303, %v359
    %vm362 = vcmask 1045509
    %v363 = vsel %vm362, %v309, %v361
    %vm364 = vcmask 1046534
    %v365 = vsel %vm364, %v315, %v363
    %vm366 = vcmask 1047559
    %v367 = vsel %vm366, %v321, %v365
    %369 = vmatprep.subr.mxu0 0.0
    %370 = vmatpush1.msra.mxu0 %v322
    %371 = vmatprep.subr.mxu0 0.0
    %372 = vmatpush1.msra.mxu0 %v323
    %373 = vmatprep.subr.mxu0 0.0
    %374 = vmatpush1.msra.mxu0 %v324
    %375 = vmatprep.subr.mxu0 0.0
    %376 = vmatpush1.msra.mxu0 %v325
    %377 = vmatprep.subr.mxu0 0.0
    %378 = vmatpush1.msra.mxu0 %v326
    %379 = vmatprep.subr.mxu0 0.0
    %380 = vmatpush1.msra.mxu0 %v327
    %381 = vmatprep.subr.mxu0 0.0
    %382 = vmatpush1.msra.mxu0 %v328
    %383 = vmatprep.subr.mxu0 0.0
    %384 = vmatpush1.msra.mxu0 %v329
    %385 = vmatprep.subr.mxu0 0.0
    %386 = vmatpush1.msra.mxu0 %v330
    %387 = vmatprep.subr.mxu0 0.0
    %388 = vmatpush1.msra.mxu0 %v331
    %389 = vmatprep.subr.mxu0 0.0
    %390 = vmatpush1.msra.mxu0 %v332
    %391 = vmatprep.subr.mxu0 0.0
    %392 = vmatpush1.msra.mxu0 %v333
    %393 = vmatprep.subr.mxu0 0.0
    %394 = vmatpush1.msra.mxu0 %v334
    %395 = vmatprep.subr.mxu0 0.0
    %396 = vmatpush1.msra.mxu0 %v335
    %397 = vmatprep.subr.mxu0 0.0
    %398 = vmatpush1.msra.mxu0 %v336
    %399 = vmatprep.subr.mxu0 0.0
    %400 = vmatpush1.msra.mxu0 %v337
    %401 = vmatprep.subr.mxu0 0.0
    %402 = vmatpush1.msra.mxu0 0.0
    %403 = vmatprep.subr.mxu0 0.0
    %404 = vmatpush1.msra.mxu0 0.0
    %405 = vmatprep.subr.mxu0 0.0
    %406 = vmatpush1.msra.mxu0 0.0
    %407 = vmatprep.subr.mxu0 0.0
    %408 = vmatpush1.msra.mxu0 0.0
    %409 = vmatprep.subr.mxu0 0.0
    %410 = vmatpush1.msra.mxu0 0.0
    %411 = vmatprep.subr.mxu0 0.0
    %412 = vmatpush1.msra.mxu0 0.0
    %413 = vmatprep.subr.mxu0 0.0
    %414 = vmatpush1.msra.mxu0 0.0
    %415 = vmatprep.subr.mxu0 0.0
    %416 = vmatpush1.msra.mxu0 0.0
    %417 = vmatprep.subr.mxu0 0.0
    %418 = vmatpush1.msra.mxu0 0.0
    %419 = vmatprep.subr.mxu0 0.0
    %420 = vmatpush1.msra.mxu0 0.0
    %421 = vmatprep.subr.mxu0 0.0
    %422 = vmatpush1.msra.mxu0 0.0
    %423 = vmatprep.subr.mxu0 0.0
    %424 = vmatpush1.msra.mxu0 0.0
    %425 = vmatprep.subr.mxu0 0.0
    %426 = vmatpush1.msra.mxu0 0.0
    %427 = vmatprep.subr.mxu0 0.0
    %428 = vmatpush1.msra.mxu0 0.0
    %429 = vmatprep.subr.mxu0 0.0
    %430 = vmatpush1.msra.mxu0 0.0
    %431 = vmatprep.subr.mxu0 0.0
    %432 = vmatpush1.msra.mxu0 0.0
    %433 = vmatprep.mubr.f32.mxu0 0.0
    %434 = vmatmul.mubr.f32.gmra.mrb[0].mxu0 %v367
    %v435 = vpop.f32.mrb[0].mxu0
    %v436 = vadd.f32 %v344, %v435
    %v437 = vpop.f32.mrb[0].mxu0
    %438 = vdwg.mxu0
    %v439 = vld [vmem:[#allocation10] sm:$0xff]
    %v440 = vld [vmem:[#allocation10 + $0x8] sm:$0xff]
    %v441 = vld [vmem:[#allocation10 + $0x10] sm:$0xff]
    %v442 = vld [vmem:[#allocation10 + $0x18] sm:$0xff]
    %v443 = vld [vmem:[#allocation10 + $0x20] sm:$0xff]
    %v444 = vld [vmem:[#allocation10 + $0x28] sm:$0xff]
    %v445 = vld [vmem:[#allocation10 + $0x30] sm:$0xff]
    %v446 = vld [vmem:[#allocation10 + $0x38] sm:$0xff]
    %v447 = vld [vmem:[#allocation10 + $0x40] sm:$0xff]
    %v448 = vld [vmem:[#allocation10 + $0x48] sm:$0xff]
    %v449 = vld [vmem:[#allocation10 + $0x50] sm:$0xff]
    %v450 = vld [vmem:[#allocation10 + $0x58] sm:$0xff]
    %v451 = vld [vmem:[#allocation10 + $0x60] sm:$0xff]
    %v452 = vld [vmem:[#allocation10 + $0x68] sm:$0xff]
    %v453 = vld [vmem:[#allocation10 + $0x70] sm:$0xff]
    %v454 = vld [vmem:[#allocation10 + $0x78] sm:$0xff]
    %v455 = vld [vmem:[#allocation5] sm:$0xff]
    %v456 = vld [vmem:[%s7] sm:$0xff]
    %vm457 = vcmask 64512
    %v459 = vsel %vm457, %v455, 0
    %461 = vmatprep.subr.mxu0 0.0
    %462 = vmatpush1.msra.mxu0 %v456
    %463 = vmatprep.subr.mxu0 0.0
    %464 = vmatpush1.msra.mxu0 0.0
    %465 = vmatprep.subr.mxu0 0.0
    %466 = vmatpush1.msra.mxu0 0.0
    %467 = vmatprep.subr.mxu0 0.0
    %468 = vmatpush1.msra.mxu0 0.0
    %469 = vmatprep.subr.mxu0 0.0
    %470 = vmatpush1.msra.mxu0 0.0
    %471 = vmatprep.subr.mxu0 0.0
    %472 = vmatpush1.msra.mxu0 0.0
    %473 = vmatprep.subr.mxu0 0.0
    %474 = vmatpush1.msra.mxu0 0.0
    %475 = vmatprep.subr.mxu0 0.0
    %476 = vmatpush1.msra.mxu0 0.0
    %477 = vmatprep.subr.mxu0 0.0
    %478 = vmatpush1.msra.mxu0 0.0
    %479 = vmatprep.subr.mxu0 0.0
    %480 = vmatpush1.msra.mxu0 0.0
    %481 = vmatprep.subr.mxu0 0.0
    %482 = vmatpush1.msra.mxu0 0.0
    %483 = vmatprep.subr.mxu0 0.0
    %484 = vmatpush1.msra.mxu0 0.0
    %485 = vmatprep.subr.mxu0 0.0
    %486 = vmatpush1.msra.mxu0 0.0
    %487 = vmatprep.subr.mxu0 0.0
    %488 = vmatpush1.msra.mxu0 0.0
    %489 = vmatprep.subr.mxu0 0.0
    %490 = vmatpush1.msra.mxu0 0.0
    %491 = vmatprep.subr.mxu0 0.0
    %492 = vmatpush1.msra.mxu0 0.0
    %493 = vmatprep.subr.mxu0 0.0
    %494 = vmatpush1.msra.mxu0 0.0
    %495 = vmatprep.subr.mxu0 0.0
    %496 = vmatpush1.msra.mxu0 0.0
    %497 = vmatprep.subr.mxu0 0.0
    %498 = vmatpush1.msra.mxu0 0.0
    %499 = vmatprep.subr.mxu0 0.0
    %500 = vmatpush1.msra.mxu0 0.0
    %501 = vmatprep.subr.mxu0 0.0
    %502 = vmatpush1.msra.mxu0 0.0
    %503 = vmatprep.subr.mxu0 0.0
    %504 = vmatpush1.msra.mxu0 0.0
    %505 = vmatprep.subr.mxu0 0.0
    %506 = vmatpush1.msra.mxu0 0.0
    %507 = vmatprep.subr.mxu0 0.0
    %508 = vmatpush1.msra.mxu0 0.0
    %509 = vmatprep.subr.mxu0 0.0
    %510 = vmatpush1.msra.mxu0 0.0
    %511 = vmatprep.subr.mxu0 0.0
    %512 = vmatpush1.msra.mxu0 0.0
    %513 = vmatprep.subr.mxu0 0.0
    %514 = vmatpush1.msra.mxu0 0.0
    %515 = vmatprep.subr.mxu0 0.0
    %516 = vmatpush1.msra.mxu0 0.0
    %517 = vmatprep.subr.mxu0 0.0
    %518 = vmatpush1.msra.mxu0 0.0
    %519 = vmatprep.subr.mxu0 0.0
    %520 = vmatpush1.msra.mxu0 0.0
    %521 = vmatprep.subr.mxu0 0.0
    %522 = vmatpush1.msra.mxu0 0.0
    %523 = vmatprep.subr.mxu0 0.0
    %524 = vmatpush1.msra.mxu0 0.0
    %525 = vmatprep.mubr.f32.mxu0 0.0
    %526 = vmatmul.mubr.f32.gmra.mrb[0].mxu0 %v459
    %v527 = vpop.f32.mrb[0].mxu0
    %v528 = vadd.f32 0.0, %v527
    %v529 = vpop.f32.mrb[0].mxu0
    %530 = vdwg.mxu0
    %531 = vmatprep.subr.mxu0 0.0
    %532 = vmatpush1.msra.mxu0 %v439
    %533 = vmatprep.subr.mxu0 0.0
    %534 = vmatpush1.msra.mxu0 %v440
    %535 = vmatprep.subr.mxu0 0.0
    %536 = vmatpush1.msra.mxu0 %v441
    %537 = vmatprep.subr.mxu0 0.0
    %538 = vmatpush1.msra.mxu0 %v442
    %539 = vmatprep.subr.mxu0 0.0
    %540 = vmatpush1.msra.mxu0 %v443
    %541 = vmatprep.subr.mxu0 0.0
    %542 = vmatpush1.msra.mxu0 %v444
    %543 = vmatprep.subr.mxu0 0.0
    %544 = vmatpush1.msra.mxu0 %v445
    %545 = vmatprep.subr.mxu0 0.0
    %546 = vmatpush1.msra.mxu0 %v446
    %547 = vmatprep.subr.mxu0 0.0
    %548 = vmatpush1.msra.mxu0 %v447
    %549 = vmatprep.subr.mxu0 0.0
    %550 = vmatpush1.msra.mxu0 %v448
    %551 = vmatprep.subr.mxu0 0.0
    %552 = vmatpush1.msra.mxu0 %v449
    %553 = vmatprep.subr.mxu0 0.0
    %554 = vmatpush1.msra.mxu0 %v450
    %555 = vmatprep.subr.mxu0 0.0
    %556 = vmatpush1.msra.mxu0 %v451
    %557 = vmatprep.subr.mxu0 0.0
    %558 = vmatpush1.msra.mxu0 %v452
    %559 = vmatprep.subr.mxu0 0.0
    %560 = vmatpush1.msra.mxu0 %v453
    %561 = vmatprep.subr.mxu0 0.0
    %562 = vmatpush1.msra.mxu0 %v454
    %563 = vmatprep.subr.mxu0 0.0
    %564 = vmatpush1.msra.mxu0 0.0
    %565 = vmatprep.subr.mxu0 0.0
    %566 = vmatpush1.msra.mxu0 0.0
    %567 = vmatprep.subr.mxu0 0.0
    %568 = vmatpush1.msra.mxu0 0.0
    %569 = vmatprep.subr.mxu0 0.0
    %570 = vmatpush1.msra.mxu0 0.0
    %571 = vmatprep.subr.mxu0 0.0
    %572 = vmatpush1.msra.mxu0 0.0
    %573 = vmatprep.subr.mxu0 0.0
    %574 = vmatpush1.msra.mxu0 0.0
    %575 = vmatprep.subr.mxu0 0.0
    %576 = vmatpush1.msra.mxu0 0.0
    %577 = vmatprep.subr.mxu0 0.0
    %578 = vmatpush1.msra.mxu0 0.0
    %579 = vmatprep.subr.mxu0 0.0
    %580 = vmatpush1.msra.mxu0 0.0
    %581 = vmatprep.subr.mxu0 0.0
    %582 = vmatpush1.msra.mxu0 0.0
    %583 = vmatprep.subr.mxu0 0.0
    %584 = vmatpush1.msra.mxu0 0.0
    %585 = vmatprep.subr.mxu0 0.0
    %586 = vmatpush1.msra.mxu0 0.0
    %587 = vmatprep.subr.mxu0 0.0
    %588 = vmatpush1.msra.mxu0 0.0
    %589 = vmatprep.subr.mxu0 0.0
    %590 = vmatpush1.msra.mxu0 0.0
    %591 = vmatprep.subr.mxu0 0.0
    %592 = vmatpush1.msra.mxu0 0.0
    %593 = vmatprep.subr.mxu0 0.0
    %594 = vmatpush1.msra.mxu0 0.0
    %595 = vmatprep.mubr.f32.mxu0 0.0
    %596 = vmatmul.mubr.f32.gmra.mrb[0].mxu0 %v436
    %v597 = vpop.f32.mrb[0].mxu0
    %v598 = vadd.f32 %v528, %v597
    %v599 = vpop.f32.mrb[0].mxu0
    %600 = vdwg.mxu0
    %v601 = vld [vmem:[%s8] sm:$0x1]
    %v603 = vlaneseq
    %v604 = vshrl.u32 %v603, 7
    %v605 = vsub.s32 0, %v604
    %v606 = vrot.slane %v601, %v605
    %v608 = vadd.f32 %v598, %v606
    %v609 = vtanh.pop %v608
    %v610 = vld [vmem:[#allocation11] sm:$0xff]
    %v611 = vld [vmem:[#allocation11 + $0x8] sm:$0xff]
    %v612 = vld [vmem:[#allocation11 + $0x10] sm:$0xff]
    %v613 = vld [vmem:[#allocation11 + $0x18] sm:$0xff]
    %v614 = vld [vmem:[#allocation11 + $0x20] sm:$0xff]
    %v615 = vld [vmem:[#allocation11 + $0x28] sm:$0xff]
    %v616 = vld [vmem:[#allocation11 + $0x30] sm:$0xff]
    %v617 = vld [vmem:[#allocation11 + $0x38] sm:$0xff]
    %v618 = vld [vmem:[#allocation11 + $0x40] sm:$0xff]
    %v619 = vld [vmem:[#allocation11 + $0x48] sm:$0xff]
    %v620 = vld [vmem:[#allocation11 + $0x50] sm:$0xff]
    %v621 = vld [vmem:[#allocation11 + $0x58] sm:$0xff]
    %v622 = vld [vmem:[#allocation11 + $0x60] sm:$0xff]
    %v623 = vld [vmem:[#allocation11 + $0x68] sm:$0xff]
    %v624 = vld [vmem:[#allocation11 + $0x70] sm:$0xff]
    %v625 = vld [vmem:[#allocation11 + $0x78] sm:$0xff]
    %v626 = vld [vmem:[%s10] sm:$0x1]
    %v628 = vlaneseq
    %v629 = vshrl.u32 %v628, 7
    %v630 = vsub.s32 0, %v629
    %v631 = vrot.slane %v626, %v630
    %633 = vmatprep.subr.mxu0 0.0
    %634 = vmatpush1.msra.mxu0 %v610
    %635 = vmatprep.subr.mxu0 0.0
    %636 = vmatpush1.msra.mxu0 %v611
    %637 = vmatprep.subr.mxu0 0.0
    %638 = vmatpush1.msra.mxu0 %v612
    %639 = vmatprep.subr.mxu0 0.0
    %640 = vmatpush1.msra.mxu0 %v613
    %641 = vmatprep.subr.mxu0 0.0
    %642 = vmatpush1.msra.mxu0 %v614
    %643 = vmatprep.subr.mxu0 0.0
    %644 = vmatpush1.msra.mxu0 %v615
    %645 = vmatprep.subr.mxu0 0.0
    %646 = vmatpush1.msra.mxu0 %v616
    %647 = vmatprep.subr.mxu0 0.0
    %648 = vmatpush1.msra.mxu0 %v617
    %649 = vmatprep.subr.mxu0 0.0
    %650 = vmatpush1.msra.mxu0 %v618
    %651 = vmatprep.subr.mxu0 0.0
    %652 = vmatpush1.msra.mxu0 %v619
    %653 = vmatprep.subr.mxu0 0.0
    %654 = vmatpush1.msra.mxu0 %v620
    %655 = vmatprep.subr.mxu0 0.0
    %656 = vmatpush1.msra.mxu0 %v621
    %657 = vmatprep.subr.mxu0 0.0
    %658 = vmatpush1.msra.mxu0 %v622
    %659 = vmatprep.subr.mxu0 0.0
    %660 = vmatpush1.msra.mxu0 %v623
    %661 = vmatprep.subr.mxu0 0.0
    %662 = vmatpush1.msra.mxu0 %v624
    %663 = vmatprep.subr.mxu0 0.0
    %664 = vmatpush1.msra.mxu0 %v625
    %665 = vmatprep.subr.mxu0 0.0
    %666 = vmatpush1.msra.mxu0 0.0
    %667 = vmatprep.subr.mxu0 0.0
    %668 = vmatpush1.msra.mxu0 0.0
    %669 = vmatprep.subr.mxu0 0.0
    %670 = vmatpush1.msra.mxu0 0.0
    %671 = vmatprep.subr.mxu0 0.0
    %672 = vmatpush1.msra.mxu0 0.0
    %673 = vmatprep.subr.mxu0 0.0
    %674 = vmatpush1.msra.mxu0 0.0
    %675 = vmatprep.subr.mxu0 0.0
    %676 = vmatpush1.msra.mxu0 0.0
    %677 = vmatprep.subr.mxu0 0.0
    %678 = vmatpush1.msra.mxu0 0.0
    %679 = vmatprep.subr.mxu0 0.0
    %680 = vmatpush1.msra.mxu0 0.0
    %681 = vmatprep.subr.mxu0 0.0
    %682 = vmatpush1.msra.mxu0 0.0
    %683 = vmatprep.subr.mxu0 0.0
    %684 = vmatpush1.msra.mxu0 0.0
    %685 = vmatprep.subr.mxu0 0.0
    %686 = vmatpush1.msra.mxu0 0.0
    %687 = vmatprep.subr.mxu0 0.0
    %688 = vmatpush1.msra.mxu0 0.0
    %689 = vmatprep.subr.mxu0 0.0
    %690 = vmatpush1.msra.mxu0 0.0
    %691 = vmatprep.subr.mxu0 0.0
    %692 = vmatpush1.msra.mxu0 0.0
    %693 = vmatprep.subr.mxu0 0.0
    %694 = vmatpush1.msra.mxu0 0.0
    %695 = vmatprep.subr.mxu0 0.0
    %696 = vmatpush1.msra.mxu0 0.0
    %697 = vmatprep.mubr.f32.mxu0 0.0
    %698 = vmatmul.mubr.f32.gmra.mrb[0].mxu0 %v609
    %v699 = vpop.f32.mrb[0].mxu0
    %v700 = vadd.f32 %v631, %v699
    %v701 = vpop.f32.mrb[0].mxu0
    %702 = vdwg.mxu0
    %703 = vst [vmem:[#allocation13] sm:$0xff] %v700
    // Predicated region
    $region70: #{tpu_custom_call.1} parent=1 // pred_check
      _
    $region71: #{tpu_custom_call.1} parent=1 // pred_check_branch
      %705 = sbr.rel (0) target = $region73
    $region72: #{tpu_custom_call.1} parent=1 // pred_region
      %s707 = ssub.s32 128, 128
      %708 = vsyncadd [#allocation4], %s707
      %s710 = sshll.u32 [#allocation13], 4
      %s711 = int_to_ptr.vmem [resolvable:$true] %s710
      %713 = dma.vmem_to_hbm [thread:$0]  %s711, 128, %s11, [#allocation4]
    $region73: #{tpu_custom_call.1} parent=1 // pred_fallthru
      _
    // Predicated region
    $region74: #{tpu_custom_call.1} parent=1 // pred_check
      _
    $region75: #{tpu_custom_call.1} parent=1 // pred_check_branch
      %715 = sbr.rel (0) target = $region77
    $region76: #{tpu_custom_call.1} parent=1 // pred_region
      %716 = dma.done [#allocation4], 128
    $region77: #{tpu_custom_call.1} parent=1 // pred_fallthru
      _
    %717 = vsyncpa [#allocation3], 1
    %718 = vsyncpa [#allocation6], 1
    %719 = vsyncpa [#allocation9], 1
    %720 = vsyncpa [#allocation12], 1
    %721 = vsyncpa [#allocation4], 1

</llo_original>
